<compile_context>
chip_gen: v6e
topology: v6e:2x2x1
jax: 0.10.0
libtpu: 0.0.40
codegen_flags: <defaults>
</compile_context>

<pallas_src>
import bisect
import math

import jax
import jax.numpy as jnp
from jax.experimental import pallas as pl
from jax.experimental.pallas import tpu as pltpu

# ---- small synthetic configuration (real config: D=512, 12 layers, 8 heads) ----
B = 2            # batch
B_TILE = 2       # batch rows folded per grid step (use 4-8 at the real config)
T_IN = 16        # raw time frames T'
F_IN = 80        # input feature dim (log-mel)
F_PAD = 128      # zero-padded input feature dim (lane-dense frontend matmul)
TIME_RED = 2     # frontend time reduction
T = T_IN // TIME_RED
D = 64           # model dim (toy; real 512 — note D<128 lanes is toy-only)
H = 4 * D        # feed-forward hidden dim
NH = 4           # attention heads
HD = D // NH     # head dim
K = 7            # depthwise conv kernel size (odd)
NUM_LAYERS = 4
EPS = 1e-5
assert B % B_TILE == 0

# indices into the packed per-layer (NUM_VEC_D, D) vector slab
(V_FF1_LN_G, V_FF1_LN_B, V_FF1_BO,
 V_CONV_LN_G, V_CONV_LN_B, V_PW1_BV, V_PW1_BG, V_DW_B,
 V_BN_SCALE, V_BN_SHIFT, V_PW2_B,
 V_MHSA_LN_G, V_MHSA_LN_B, V_QKV_BQ, V_QKV_BK, V_QKV_BV, V_MHSA_BO,
 V_FF2_LN_G, V_FF2_LN_B, V_FF2_BO,
 V_FINAL_LN_G, V_FINAL_LN_B) = range(22)
NUM_VEC_D = 22
ONE_INIT_VEC_IDX = (V_FF1_LN_G, V_CONV_LN_G, V_MHSA_LN_G, V_FF2_LN_G, V_FINAL_LN_G)


def _vmem_limit_bytes():
    # per-generation VMEM budget: ~75% of physical, capped (v7x 64 MiB -> 48 MiB,
    # v5e/v6e 128 MiB -> 96 MiB).  Falls back to 48 MiB if the query is unavailable.
    try:
        cap = int(getattr(pltpu.get_tpu_info(), "vmem_capacity_bytes"))
    except Exception:
        cap = 64 * 1024 * 1024
    return min((cap * 3) // 4, 100 * 1024 * 1024)


def _row_tile(rows):
    for t in (1024, 512, 256, 128, 64, 32, 16, 8):
        if rows % t == 0:
            return t
    return rows


def _layer_norm(x, g, b):
    mean = jnp.mean(x, axis=-1, keepdims=True)
    var = jnp.mean(jnp.square(x - mean), axis=-1, keepdims=True)
    return (x - mean) * jax.lax.rsqrt(var + EPS) * g + b


def _silu(x):
    return x * jax.nn.sigmoid(x)


# ------------------------- frontend kernel (linear) -------------------------
def frontend_kernel(x_ref, w_ref, b_ref, o_ref):
    o_ref[...] = (jnp.dot(x_ref[...].astype(jnp.bfloat16), w_ref[...],
                          preferred_element_type=jnp.float32)
                  + b_ref[...]).astype(o_ref.dtype)


def frontend_call(x2d, w, b):
    rows = x2d.shape[0]
    rt = _row_tile(rows)
    return pl.pallas_call(
        frontend_kernel,
        out_shape=jax.ShapeDtypeStruct((rows, D), jnp.float32),
        grid_spec=pltpu.PrefetchScalarGridSpec(
            num_scalar_prefetch=0,
            grid=(rows // rt,),
            in_specs=[pl.BlockSpec((rt, F_PAD), lambda r: (r, 0)),
                      pl.BlockSpec((F_PAD, D), lambda r: (0, 0)),   # weight fetched once
                      pl.BlockSpec((1, D), lambda r: (0, 0))],
            out_specs=pl.BlockSpec((rt, D), lambda r: (r, 0)),
        ),
        compiler_params=pltpu.CompilerParams(
            dimension_semantics=("parallel",),
            vmem_limit_bytes=_vmem_limit_bytes(),
        ),
    )(x2d, w, b)


# ------------------ fused conformer stack kernel (all layers) ----------------
def conformer_stack_kernel(slots_ref, isaux_ref,                  # scalar prefetch (SMEM)
                           x_ref, mask_ref,                       # activations / mask
                           w_sq_ref, w_ff_in_ref, w_ff_out_ref, w_qkv_ref,
                           vecd_ref, vech_ref, dw_ref,            # packed small params
                           out_ref,                               # (1,B_TILE,T,D) aux block
                           xacc_ref, bias_ref):                   # resident activations / bias
    l = pl.program_id(1)
    M = B_TILE * T

    # load x from HBM and build the key-padding bias once per batch tile;
    # both stay resident in VMEM across the layer sweep.
    @pl.when(l == 0)
    def _():
        xacc_ref[...] = x_ref[...].reshape(M, D).astype(jnp.float32)
        bias_ref[...] = jnp.where(mask_ref[...] > 0.5, 0.0, -1e30)

    x = xacc_ref[...]                                    # (M, D) f32
    vecd = vecd_ref[0]                                   # (NUM_VEC_D, D) f32
    vech = vech_ref[0]                                   # (2, H) f32

    def vrow(i):                                         # (1, D) slice of the vector slab
        return vecd[i:i + 1, :]

    # ---------------- FF1 (half residual) ----------------
    h = _layer_norm(x, vrow(V_FF1_LN_G), vrow(V_FF1_LN_B))
    h = jnp.dot(h.astype(jnp.bfloat16), w_ff_in_ref[0, 0],
                preferred_element_type=jnp.float32) + vech[0:1, :]
    h = _silu(h)   # TODO(synk): keep the (M,H) hidden in bf16 on v6e/v7x (f32 is v5e-safe)
    h = jnp.dot(h.astype(jnp.bfloat16), w_ff_out_ref[0, 0],
                preferred_element_type=jnp.float32) + vrow(V_FF1_BO)
    x = 0.5 * h + x

    # ---------------- convolution module ----------------
    y = _layer_norm(x, vrow(V_CONV_LN_G), vrow(V_CONV_LN_B))
    yb = y.astype(jnp.bfloat16)
    # GLU as two (M,D)@(D,D) matmuls (value / gate): no (M,2D) temp, no lane split
    val = jnp.dot(yb, w_sq_ref[0, 0], preferred_element_type=jnp.float32) + vrow(V_PW1_BV)
    gate = jnp.dot(yb, w_sq_ref[0, 1], preferred_element_type=jnp.float32) + vrow(V_PW1_BG)
    y = val * jax.nn.sigmoid(gate)                       # (M, D)

    # depthwise conv1d with 'same' zero padding: XLU rolls + per-sequence edge masks.
    # Rolling the stacked (B_TILE*T, D) slab is safe: in-sequence taps never wrap,
    # out-of-sequence taps are zeroed by the mask.
    dw = dw_ref[0]                                       # (K, D) f32 depthwise taps
    pad = (K - 1) // 2
    row = jax.lax.broadcasted_iota(jnp.int32, (M, 1), 0)
    tpos = jax.lax.rem(row, T)                           # frame index within each sequence
    acc = jnp.zeros((M, D), jnp.float32)
    for k in range(K):
        off = k - pad                                    # source frame offset
        if off == 0:
            shifted = y
        else:
            shifted = pltpu.roll(y, shift=(-off) % M, axis=0)
            inb = jnp.logical_and(tpos + off >= 0, tpos + off < T)
            shifted = jnp.where(inb, shifted, 0.0)       # zero padding frames
        acc = acc + shifted * dw[k:k + 1, :]
    y = acc + vrow(V_DW_B)
    # BatchNorm1d eval-mode stats pre-folded host-side into scale/shift
    y = y * vrow(V_BN_SCALE) + vrow(V_BN_SHIFT)
    y = _silu(y)
    y = jnp.dot(y.astype(jnp.bfloat16), w_sq_ref[0, 2],
                preferred_element_type=jnp.float32) + vrow(V_PW2_B)
    x = y + x

    # ---------------- MHSA (key padding mask) ----------------
    y = _layer_norm(x, vrow(V_MHSA_LN_G), vrow(V_MHSA_LN_B))
    # fused, lane-dense QKV projection: one (M,D)@(D,3D) matmul
    qkv = jnp.dot(y.astype(jnp.bfloat16), w_qkv_ref[0],
                  preferred_element_type=jnp.float32)    # (M, 3D)
    q = (qkv[:, 0:D] + vrow(V_QKV_BQ)) * (1.0 / math.sqrt(HD))
    kk = qkv[:, D:2 * D] + vrow(V_QKV_BK)
    v = qkv[:, 2 * D:3 * D] + vrow(V_QKV_BV)
    bias = bias_ref[...]                                 # (B_TILE, 1, T), layer-invariant

    ctx_parts = []
    for hh in range(NH):                                 # heads split only for the scores
        lo, hi = hh * HD, (hh + 1) * HD
        qh = q[:, lo:hi].reshape(B_TILE, T, HD).astype(jnp.bfloat16)
        kh = kk[:, lo:hi].reshape(B_TILE, T, HD).astype(jnp.bfloat16)
        vh = v[:, lo:hi].reshape(B_TILE, T, HD).astype(jnp.bfloat16)
        s = jnp.einsum('bqd,bkd->bqk', qh, kh,
                       preferred_element_type=jnp.float32)      # (B_TILE, T, T)
        s = s + bias                                            # mask padded keys
        s = s - jnp.max(s, axis=-1, keepdims=True)
        p = jnp.exp(s)
        p = p * pl.reciprocal(jnp.sum(p, axis=-1, keepdims=True), approx=True)
        c = jnp.einsum('bqk,bkd->bqd', p.astype(jnp.bfloat16), vh,
                       preferred_element_type=jnp.float32)      # (B_TILE, T, HD)
        ctx_parts.append(c)
    ctx = jnp.concatenate(ctx_parts, axis=-1).reshape(M, D)     # merge heads (lanes)
    # single lane-dense output projection (M,D)@(D,D)
    attn = jnp.dot(ctx.astype(jnp.bfloat16), w_sq_ref[0, 3],
                   preferred_element_type=jnp.float32) + vrow(V_MHSA_BO)
    x = attn + x

    # ---------------- FF2 (half residual) ----------------
    h = _layer_norm(x, vrow(V_FF2_LN_G), vrow(V_FF2_LN_B))
    h = jnp.dot(h.astype(jnp.bfloat16), w_ff_in_ref[0, 1],
                preferred_element_type=jnp.float32) + vech[1:2, :]
    h = _silu(h)
    h = jnp.dot(h.astype(jnp.bfloat16), w_ff_out_ref[0, 1],
                preferred_element_type=jnp.float32) + vrow(V_FF2_BO)
    x = 0.5 * h + x

    # ---------------- final layer norm ----------------
    x = _layer_norm(x, vrow(V_FINAL_LN_G), vrow(V_FINAL_LN_B))
    xacc_ref[...] = x

    # emit this layer's output only at aux-loss layers; the VMEM-resident output
    # block is flushed to HBM when its slot index changes.
    @pl.when(isaux_ref[l] == 1)
    def _():
        out_ref[0] = x.reshape(B_TILE, T, D).astype(out_ref.dtype)


def conformer_stack_call(x, mask_f, stacked, slots, isaux, num_aux):
    (w_sq, w_ff_in, w_ff_out, w_qkv, vecd, vech, dw) = stacked
    in_specs = [
        pl.BlockSpec((B_TILE, T, D), lambda b, l, s, a: (b, 0, 0)),       # x (layer-invariant)
        pl.BlockSpec((B_TILE, 1, T), lambda b, l, s, a: (b, 0, 0)),       # mask
        pl.BlockSpec((1, 4, D, D), lambda b, l, s, a: (l, 0, 0, 0)),      # pw1 val/gate, pw2, attn-out
        pl.BlockSpec((1, 2, D, H), lambda b, l, s, a: (l, 0, 0, 0)),      # FF input projections
        pl.BlockSpec((1, 2, H, D), lambda b, l, s, a: (l, 0, 0, 0)),      # FF output projections
        pl.BlockSpec((1, D, 3 * D), lambda b, l, s, a: (l, 0, 0)),        # fused q|k|v weight
        pl.BlockSpec((1, NUM_VEC_D, D), lambda b, l, s, a: (l, 0, 0)),    # packed D-wide vectors
        pl.BlockSpec((1, 2, H), lambda b, l, s, a: (l, 0, 0)),            # packed H-wide vectors
        pl.BlockSpec((1, K, D), lambda b, l, s, a: (l, 0, 0)),            # depthwise conv taps
    ]
    out_spec = pl.BlockSpec((1, B_TILE, T, D), lambda b, l, s, a: (s[l], b, 0, 0))
    return pl.pallas_call(
        conformer_stack_kernel,
        out_shape=jax.ShapeDtypeStruct((num_aux, B, T, D), jnp.float32),
        grid_spec=pltpu.PrefetchScalarGridSpec(
            num_scalar_prefetch=2,
            grid=(B // B_TILE, NUM_LAYERS),
            in_specs=in_specs,
            out_specs=out_spec,
            scratch_shapes=[pltpu.VMEM((B_TILE * T, D), jnp.float32),
                            pltpu.VMEM((B_TILE, 1, T), jnp.float32)],
        ),
        compiler_params=pltpu.CompilerParams(
            # batch-tile axis megacore-parallel (v7x), layer axis is a sequential carry.
            # Note: on v7x both TCs stream the full weight set; the B_TILE fold
            # amortizes that traffic over B_TILE*T rows per fetch.
            dimension_semantics=("parallel", "arbitrary"),
            vmem_limit_bytes=_vmem_limit_bytes(),
        ),
    )(slots, isaux, x, mask_f, w_sq, w_ff_in, w_ff_out, w_qkv, vecd, vech, dw)


# ------------------------------ encoder glue --------------------------------
def conformer_encoder_forward(data, sequence_mask, aux_losses, params):
    """data: [B, T', F_IN] f32; sequence_mask: [B, T'] bool (True = valid frame)."""
    frontend_w, frontend_b, stacked = params
    # TODO(synk): the real cfg.frontend() is a configurable VGG-style conv subsampling
    # frontend; approximated here as stride-TIME_RED frame subsampling + a Pallas
    # linear projection F_IN -> D (input zero-padded to 128 features for lane density).
    x_sub = data[:, ::TIME_RED, :].reshape(B * T, F_IN)
    x_sub = jnp.pad(x_sub, ((0, 0), (0, F_PAD - F_IN)))
    mask_sub = sequence_mask[:, ::TIME_RED]
    x = frontend_call(x_sub, frontend_w, frontend_b).reshape(B, T, D)
    mask_f = mask_sub.astype(jnp.float32).reshape(B, 1, T)

    # aux-loss layer indices (0-based); PyTorch appends in layer order
    aux_idx = sorted(int(i) - 1 for i in aux_losses.keys())
    num_aux = len(aux_idx)
    # slot table: slot j is "current" for layers (aux[j-1], aux[j]]; it is written
    # exactly once (at its aux layer) and flushed to HBM when the slot changes.
    slots = jnp.array([min(bisect.bisect_left(aux_idx, l), num_aux - 1)
                       for l in range(NUM_LAYERS)], jnp.int32)
    isaux = jnp.array([1 if l in aux_idx else 0 for l in range(NUM_LAYERS)], jnp.int32)

    out = conformer_stack_call(x, mask_f, stacked, slots, isaux, num_aux)
    outputs = [out[j] for j in range(num_aux)]
    return outputs, mask_sub


def init_params(key):
    keys = jax.random.split(key, 16)

    def nrm(k, shape, scale=0.05):
        return scale * jax.random.normal(k, shape, jnp.float32)

    frontend_w = jnp.zeros((F_PAD, D), jnp.float32)
    frontend_w = frontend_w.at[:F_IN].set(nrm(keys[0], (F_IN, D))).astype(jnp.bfloat16)
    frontend_b = nrm(keys[1], (1, D), 0.02)

    # matmul weights in bf16 (MXU-native), stacked over layers, lane-dense layouts
    w_sq = nrm(keys[2], (NUM_LAYERS, 4, D, D)).astype(jnp.bfloat16)     # pw1 val, pw1 gate, pw2, attn-out
    w_ff_in = nrm(keys[3], (NUM_LAYERS, 2, D, H)).astype(jnp.bfloat16)  # ff1, ff2 in-proj
    w_ff_out = nrm(keys[4], (NUM_LAYERS, 2, H, D)).astype(jnp.bfloat16) # ff1, ff2 out-proj
    w_qkv = nrm(keys[5], (NUM_LAYERS, D, 3 * D)).astype(jnp.bfloat16)   # fused q|k|v projection

    # packed small vectors (LN gains/biases, biases, folded BN) in f32
    vecd = nrm(keys[6], (NUM_LAYERS, NUM_VEC_D, D), 0.02)
    vecd = vecd.at[:, jnp.array(ONE_INIT_VEC_IDX), :].add(1.0)          # LN gains ~ 1
    # BatchNorm1d eval-mode statistics folded host-side into scale/shift
    bn_gamma = 1.0 + nrm(keys[7], (NUM_LAYERS, D), 0.02)
    bn_beta = nrm(keys[8], (NUM_LAYERS, D), 0.02)
    bn_mean = nrm(keys[9], (NUM_LAYERS, D), 0.02)
    bn_var = 1.0 + jnp.abs(nrm(keys[10], (NUM_LAYERS, D), 0.02))
    bn_scale = bn_gamma * jax.lax.rsqrt(bn_var + EPS)
    bn_shift = bn_beta - bn_mean * bn_scale
    vecd = vecd.at[:, V_BN_SCALE, :].set(bn_scale)
    vecd = vecd.at[:, V_BN_SHIFT, :].set(bn_shift)

    vech = nrm(keys[11], (NUM_LAYERS, 2, H), 0.02)                      # FF in-proj biases
    dw = nrm(keys[12], (NUM_LAYERS, K, D))                              # depthwise conv taps

    stacked = (w_sq, w_ff_in, w_ff_out, w_qkv, vecd, vech, dw)
    return frontend_w, frontend_b, stacked


if __name__ == "__main__":
    root = jax.random.PRNGKey(0)
    kd, kp = jax.random.split(root)
    data = jax.random.normal(kd, (B, T_IN, F_IN), jnp.float32)
    lengths = jnp.array([T_IN, T_IN - 6], jnp.int32)
    sequence_mask = jnp.arange(T_IN)[None, :] < lengths[:, None]   # True = valid

    params = init_params(kp)
    aux_losses = {"2": 0.3, str(NUM_LAYERS): 1.0}  # aux loss after layers 2 and NUM_LAYERS

    outputs, out_mask = conformer_encoder_forward(data, sequence_mask, aux_losses, params)
    for o in outputs:
        jax.block_until_ready(o)
    jax.block_until_ready(out_mask)

    assert len(outputs) == len(aux_losses)
    assert all(o.shape == (B, T, D) for o in outputs)
    assert all(bool(jnp.all(jnp.isfinite(o))) for o in outputs)
    assert out_mask.shape == (B, T)
    print("KERNEL_OK")
</pallas_src>

<mosaic_0001>
module attributes {stable_mosaic.version = 11 : i64} {
  func.func @frontend_kernel(%arg0: i32, %arg1: memref<16x128xf32, #tpu.memory_space<vmem>>, %arg2: memref<128x64xbf16, #tpu.memory_space<vmem>>, %arg3: memref<1x64xf32, #tpu.memory_space<vmem>>, %arg4: memref<16x64xf32, #tpu.memory_space<vmem>>) attributes {dimension_semantics = [#tpu.dimension_semantics<parallel>], iteration_bounds = array<i64: 1>, scalar_prefetch = 0 : i64, scratch_operands = 0 : i64, tpu.core_type = #tpu.core_type<tc>, window_params = [{transform_indices = @transform_0, window_bounds = array<i64: 16, 128>}, {pipeline_mode = #tpu.pipeline_mode<synchronous>, transform_indices = @transform_1, window_bounds = array<i64: 128, 64>}, {pipeline_mode = #tpu.pipeline_mode<synchronous>, transform_indices = @transform_2, window_bounds = array<i64: 1, 64>}, {transform_indices = @transform_3, window_bounds = array<i64: 16, 64>}]} {
    %c0 = arith.constant 0 : index
    %c0_0 = arith.constant 0 : index
    %0 = vector.load %arg1[%c0, %c0_0] : memref<16x128xf32, #tpu.memory_space<vmem>>, vector<16x128xf32>
    %1 = arith.truncf %0 : vector<16x128xf32> to vector<16x128xbf16>
    %c0_1 = arith.constant 0 : index
    %c0_2 = arith.constant 0 : index
    %2 = vector.load %arg2[%c0_1, %c0_2] : memref<128x64xbf16, #tpu.memory_space<vmem>>, vector<128x64xbf16>
    %cst = arith.constant dense<0.000000e+00> : vector<16x64xf32>
    %3 = tpu.matmul %1, %2, %cst {dimension_numbers = #tpu.dot_dimension_numbers<[1], [0], [0], [1], [0, 0, 1, 1], [], []>} : vector<16x128xbf16>, vector<128x64xbf16>, vector<16x64xf32> -> vector<16x64xf32>
    %c0_3 = arith.constant 0 : index
    %c0_4 = arith.constant 0 : index
    %4 = vector.load %arg3[%c0_3, %c0_4] : memref<1x64xf32, #tpu.memory_space<vmem>>, vector<1x64xf32>
    %5 = vector.broadcast %4 : vector<1x64xf32> to vector<16x64xf32>
    %6 = arith.addf %3, %5 : vector<16x64xf32>
    %c0_5 = arith.constant 0 : index
    %c0_6 = arith.constant 0 : index
    %7 = vector.load %arg4[%c0_5, %c0_6] : memref<16x64xf32, #tpu.memory_space<vmem>>, vector<16x64xf32>
    tpu.vector_store %arg4[%c0_5, %c0_6], %6 {strides = array<i32>} : memref<16x64xf32, #tpu.memory_space<vmem>>, vector<16x64xf32>,
    return
  }
  func.func @transform_0(%arg0: i32) -> (i32, i32) {
    %c0_i32 = arith.constant 0 : i32
    %c0_i32_0 = arith.constant 0 : i32
    return %arg0, %c0_i32 : i32, i32
  }
  func.func @transform_1(%arg0: i32) -> (i32, i32) {
    %c0_i32 = arith.constant 0 : i32
    %c0_i32_0 = arith.constant 0 : i32
    %c0_i32_1 = arith.constant 0 : i32
    return %c0_i32, %c0_i32_0 : i32, i32
  }
  func.func @transform_2(%arg0: i32) -> (i32, i32) {
    %c0_i32 = arith.constant 0 : i32
    %c0_i32_0 = arith.constant 0 : i32
    %c0_i32_1 = arith.constant 0 : i32
    return %c0_i32, %c0_i32_0 : i32, i32
  }
  func.func @transform_3(%arg0: i32) -> (i32, i32) {
    %c0_i32 = arith.constant 0 : i32
    %c0_i32_0 = arith.constant 0 : i32
    return %arg0, %c0_i32 : i32, i32
  }
}

</mosaic_0001>

<llo_original>
// kernel: tpu_custom_call.1
$region0: #{tpu_custom_call.1}
  #allocation0 [shape = 'u32[]', space=smem, size = 0x4, offset = 0x4, fixed_abs, tag = 'smem constant byte address 0x4 - core index']
  #allocation1 [shape = 'u32[144,128]{1,0:T(1,128)}', space=vmem, size = 0x12000, scoped, tag = 'internal scratch']
  %s0 = inlined_call_operand.vmem [shape: f32[16,128], index: 0, kind: input, shape index: {}]
  %s1 = inlined_call_operand.vmem [shape: bf16[128,64], index: 1, kind: input, shape index: {}]
  %s2 = inlined_call_operand.vmem [shape: f32[1,64], index: 2, kind: input, shape index: {}]
  %s3 = inlined_call_operand.hbm [shape: f32[16,64], index: 3, kind: output, shape index: {}]
  %s4 = sld [smem:[#allocation0]]
  $region22: #{tpu_custom_call.1} parent=0
    _
  %s6 = ssub.s32 1, %s4
  %s7 = scalar_select 0, %s6, %s4
  $region1: #{tpu_custom_call.1} parent=0
    #allocation2 [shape = 'u8[8192]{0}', space=vmem, size = 0x2000, scoped, tag = 'output window, operand 0, single buffered']
    #allocation3 [shape = 's32[1]{0}', space=sflag, size = 0x4, scoped, tag = 'scoped memory for tpu_custom_call.1']
    %8 = vsyncpa [#allocation3], 0
    // Predicated region
    $region2: #{tpu_custom_call.1} parent=1 // pred_check
      _
    $region3: #{tpu_custom_call.1} parent=1 // pred_check_branch
      %10 = sbr.rel (0) target = $region5
    $region4: #{tpu_custom_call.1} parent=1 // pred_region
      _
    $region5: #{tpu_custom_call.1} parent=1 // pred_fallthru
      _
    // Predicated region
    $region6: #{tpu_custom_call.1} parent=1 // pred_check
      _
    $region7: #{tpu_custom_call.1} parent=1 // pred_check_branch
      %12 = sbr.rel (0) target = $region9
    $region8: #{tpu_custom_call.1} parent=1 // pred_region
      _
    $region9: #{tpu_custom_call.1} parent=1 // pred_fallthru
      _
    // Predicated region
    $region10: #{tpu_custom_call.1} parent=1 // pred_check
      _
    $region11: #{tpu_custom_call.1} parent=1 // pred_check_branch
      %14 = sbr.rel (0) target = $region13
    $region12: #{tpu_custom_call.1} parent=1 // pred_region
      _
    $region13: #{tpu_custom_call.1} parent=1 // pred_fallthru
      _
    %v16 = vld [vmem:[%s0] sm:$0xff]
    %v17 = vld [vmem:[%s0 + $0x8] sm:$0xff]
    %v18 = vpack.c.bf16 %v17, %v16
    %v19 = vld [vmem:[%s1] sm:$0xf]
    %v20 = vld [vmem:[%s1 + $0x4] sm:$0xf]
    %v21 = vld [vmem:[%s1 + $0x8] sm:$0xf]
    %v22 = vld [vmem:[%s1 + $0xc] sm:$0xf]
    %v23 = vld [vmem:[%s1 + $0x10] sm:$0xf]
    %v24 = vld [vmem:[%s1 + $0x14] sm:$0xf]
    %v25 = vld [vmem:[%s1 + $0x18] sm:$0xf]
    %v26 = vld [vmem:[%s1 + $0x1c] sm:$0xf]
    %v27 = vld [vmem:[%s1 + $0x20] sm:$0xf]
    %v28 = vld [vmem:[%s1 + $0x24] sm:$0xf]
    %v29 = vld [vmem:[%s1 + $0x28] sm:$0xf]
    %v30 = vld [vmem:[%s1 + $0x2c] sm:$0xf]
    %v31 = vld [vmem:[%s1 + $0x30] sm:$0xf]
    %v32 = vld [vmem:[%s1 + $0x34] sm:$0xf]
    %v33 = vld [vmem:[%s1 + $0x38] sm:$0xf]
    %v34 = vld [vmem:[%s1 + $0x3c] sm:$0xf]
    %v35 = vld [vmem:[%s2] sm:$0x1]
    %v37 = vlaneseq
    %v38 = vshrl.u32 %v37, 7
    %v39 = vsub.s32 0, %v38
    %v40 = vrot.slane %v35, %v39
    %v58 = vunpack.c.l.b16 %v19
    %v59 = vunpack.c.l.b16 %v20
    %v60 = vunpack.c.l.b16 %v21
    %v61 = vunpack.c.l.b16 %v22
    %v62 = vunpack.c.l.b16 %v23
    %v63 = vunpack.c.l.b16 %v24
    %v64 = vunpack.c.l.b16 %v25
    %v65 = vunpack.c.l.b16 %v26
    %v66 = vunpack.c.l.b16 %v27
    %v67 = vunpack.c.l.b16 %v28
    %v68 = vunpack.c.l.b16 %v29
    %v69 = vunpack.c.l.b16 %v30
    %v70 = vunpack.c.l.b16 %v31
    %v71 = vunpack.c.l.b16 %v32
    %v72 = vunpack.c.l.b16 %v33
    %v73 = vunpack.c.l.b16 %v34
    %v74 = vpack.c.b16 %v59, %v58
    %v75 = vpack.c.b16 %v61, %v60
    %v76 = vpack.c.b16 %v63, %v62
    %v77 = vpack.c.b16 %v65, %v64
    %v78 = vpack.c.b16 %v67, %v66
    %v79 = vpack.c.b16 %v69, %v68
    %v80 = vpack.c.b16 %v71, %v70
    %v81 = vpack.c.b16 %v73, %v72
    %90 = vmatprep.subr.bf16.mxu0 0
    %91 = vmatpush1.bf16.msra.mxu0 %v81
    %92 = vmatprep.subr.bf16.mxu0 0
    %93 = vmatpush1.bf16.msra.mxu0 %v80
    %94 = vmatprep.subr.bf16.mxu0 0
    %95 = vmatpush1.bf16.msra.mxu0 %v79
    %96 = vmatprep.subr.bf16.mxu0 0
    %97 = vmatpush1.bf16.msra.mxu0 %v78
    %98 = vmatprep.subr.bf16.mxu0 0
    %99 = vmatpush1.bf16.msra.mxu0 %v77
    %100 = vmatprep.subr.bf16.mxu0 0
    %101 = vmatpush1.bf16.msra.mxu0 %v76
    %102 = vmatprep.subr.bf16.mxu0 0
    %103 = vmatpush1.bf16.msra.mxu0 %v75
    %104 = vmatprep.subr.bf16.mxu0 0
    %105 = vmatpush1.bf16.msra.mxu0 %v74
    %106 = vmatprep.subr.bf16.mxu0 0
    %107 = vmatpush2.bf16.msra.mxu0 0
    %108 = vmatprep.subr.bf16.mxu0 0
    %109 = vmatpush2.bf16.msra.mxu0 0
    %110 = vmatprep.subr.bf16.mxu0 0
    %111 = vmatpush2.bf16.msra.mxu0 0
    %112 = vmatprep.subr.bf16.mxu0 0
    %113 = vmatpush2.bf16.msra.mxu0 0
    %114 = vmatprep.subr.bf16.mxu0 0
    %115 = vmatpush2.bf16.msra.mxu0 0
    %116 = vmatprep.subr.bf16.mxu0 0
    %117 = vmatpush2.bf16.msra.mxu0 0
    %118 = vmatprep.subr.bf16.mxu0 0
    %119 = vmatpush2.bf16.msra.mxu0 0
    %120 = vmatprep.subr.bf16.mxu0 0
    %121 = vmatpush2.bf16.msra.mxu0 0
    %122 = vmatprep.mubr.bf16.mxu0 0
    %123 = vmatmul.mubr.bf16.gmra.mxu0 %v18
    %v124 = vpop.f32.mrf.mxu0
    %v125 = vadd.f32 %v40, %v124
    %v126 = vpop.f32.mrf.mxu0
    %v127 = vpop.f32.mrf.mxu0
    %v128 = vadd.f32 %v40, %v127
    %v129 = vpop.f32.mrf.mxu0
    %130 = vdwg.mxu0
    %vm131 = vcmask 523264
    %132 = vst.msk [vmem:[#allocation2] sm:$0xff] %vm131, %v125
    %133 = vst.msk [vmem:[#allocation2 + $0x8] sm:$0xff] %vm131, %v128
    // Predicated region
    $region14: #{tpu_custom_call.1} parent=1 // pred_check
      _
    $region15: #{tpu_custom_call.1} parent=1 // pred_check_branch
      %135 = sbr.rel (0) target = $region17
    $region16: #{tpu_custom_call.1} parent=1 // pred_region
      %s137 = ssub.s32 256, 256
      %138 = vsyncadd [#allocation3], %s137
      %s139 = sshll.u32 [#allocation2], 4
      %s140 = int_to_ptr.vmem [resolvable:$true] %s139
      %145 = dma.vmem_to_hbm [thread:$0]  %s140, 256, %s3, [#allocation3], 128, 128, 8
    $region17: #{tpu_custom_call.1} parent=1 // pred_fallthru
      _
    // Predicated region
    $region18: #{tpu_custom_call.1} parent=1 // pred_check
      _
    $region19: #{tpu_custom_call.1} parent=1 // pred_check_branch
      %147 = sbr.rel (0) target = $region21
    $region20: #{tpu_custom_call.1} parent=1 // pred_region
      %148 = dma.done [#allocation3], 256
    $region21: #{tpu_custom_call.1} parent=1 // pred_fallthru
      _
    %149 = vsyncpa [#allocation3], 1

</llo_original>
